<compile_context>
chip_gen: v5e
topology: v5e:2x2
jax: 0.10.0
libtpu: 0.0.40
codegen_flags: <defaults>
</compile_context>

<pallas_src>
import math

import jax
import jax.numpy as jnp
from jax.experimental import pallas as pl
from jax.experimental.pallas import tpu as pltpu

_MiB = 1024 * 1024
# Keep the Pallas path to dtypes Mosaic handles cleanly for this op; everything
# else (f64, complex, ints, fp16) goes to the XLA fallback.
_SUPPORTED_DTYPES = frozenset({jnp.dtype(jnp.float32), jnp.dtype(jnp.bfloat16)})


def _chip_budgets():
    """Chip-aware (tile_bytes_per_operand, vmem_limit_bytes, min_kernel_elems)."""
    vmem = 64 * _MiB  # conservative default (v7x-sized) if the query fails
    try:
        info = pltpu.get_tpu_info()
        vmem = int(getattr(info, "vmem_capacity_bytes", vmem))
    except Exception:
        pass
    # ~vmem/10 per operand: 3 streams x 2 pipeline buffers ~= 60% of VMEM,
    # capped at 8 MiB (v7x -> 6 MiB tiles, v5e/v6e -> 8 MiB tiles).
    tile_bytes = max(2 * _MiB, min(((vmem // 10) // _MiB) * _MiB, 8 * _MiB))
    vmem_limit = int(min(vmem - 8 * _MiB, 6 * tile_bytes + 8 * _MiB))
    # v7x's ~3.2 TB/s HBM makes pallas_call fixed overhead proportionally larger,
    # so use a larger XLA-fallback cutoff there.
    min_elems = (4 << 20) if vmem <= 64 * _MiB else (1 << 20)
    return tile_bytes, vmem_limit, min_elems


def _sublane(dtype) -> int:
    # Packed-dtype sublane requirement: 8 for f32, 16 for bf16, 32 for 8-bit.
    itemsize = jnp.dtype(dtype).itemsize
    return max(8, 32 // max(1, itemsize))


def _pick_lane_width(n: int):
    # Widest lane-dense last dim that divides n -> wide unmasked vst, long DMAs.
    for lane in (4096, 2048, 1024, 512, 256, 128):
        if n % lane == 0:
            return lane
    return None


def _choose_tile_rows(rows, lane, itemsize, sub, tile_bytes):
    """Pick rows-per-tile: big, sublane-aligned, dividing `rows` evenly when
    possible (no masked tail), preferring an even grid for v7x's 2 TCs."""
    max_r = tile_bytes // (lane * itemsize)
    max_r = max(sub, (max_r // sub) * sub)
    if rows <= max_r:
        # Whole array fits one tile; split in two (sublane-aligned) if possible
        # so a v7x 'parallel' grid keeps both TensorCores busy.
        if rows % (2 * sub) == 0:
            return rows // 2
        return rows  # single full-extent block (always legal)
    best_div = None
    best_even = None
    r = max_r
    while r >= sub:
        if rows % r == 0:
            if best_div is None:
                best_div = r
            if (rows // r) % 2 == 0:
                best_even = r
                break
        r -= sub
    if best_even is not None and best_even * 2 >= max_r:
        return best_even          # even grid, tile >= max_r/2
    if best_div is not None:
        return best_div           # exact split, no masked tail
    return max_r                  # fall back to cdiv grid with masked tail


def _mult_kernel(x_ref, y_ref, o_ref):
    od = o_ref.dtype
    o_ref[...] = x_ref[...].astype(od) * y_ref[...].astype(od)


def _mult_scalar_kernel(s_ref, x_ref, o_ref):
    # s_ref is the SMEM scalar-prefetch ref (shape (1,), float32).
    od = o_ref.dtype
    o_ref[...] = x_ref[...].astype(od) * s_ref[0].astype(od)


def _pallas_mult_same(x, y, out_dtype, rows, lane, tile_r, vmem_limit):
    n = rows * lane
    bytes_accessed = n * (x.dtype.itemsize + y.dtype.itemsize
                          + jnp.dtype(out_dtype).itemsize)
    cost = pl.CostEstimate(flops=n, transcendentals=0, bytes_accessed=bytes_accessed)
    return pl.pallas_call(
        _mult_kernel,
        out_shape=jax.ShapeDtypeStruct((rows, lane), out_dtype),
        grid_spec=pltpu.PrefetchScalarGridSpec(
            num_scalar_prefetch=0,
            grid=(pl.cdiv(rows, tile_r),),
            in_specs=[
                pl.BlockSpec((tile_r, lane), lambda i: (i, 0)),
                pl.BlockSpec((tile_r, lane), lambda i: (i, 0)),
            ],
            out_specs=pl.BlockSpec((tile_r, lane), lambda i: (i, 0)),
        ),
        compiler_params=pltpu.CompilerParams(
            dimension_semantics=("parallel",),   # v7x: shard row tiles over 2 TCs
            vmem_limit_bytes=vmem_limit,
        ),
        cost_estimate=cost,
    )(x.reshape(rows, lane), y.reshape(rows, lane))


def _pallas_mult_scalar(big, scalar_f32, out_dtype, rows, lane, tile_r, vmem_limit):
    n = rows * lane
    bytes_accessed = n * (big.dtype.itemsize + jnp.dtype(out_dtype).itemsize) + 4
    cost = pl.CostEstimate(flops=n, transcendentals=0, bytes_accessed=bytes_accessed)
    return pl.pallas_call(
        _mult_scalar_kernel,
        out_shape=jax.ShapeDtypeStruct((rows, lane), out_dtype),
        grid_spec=pltpu.PrefetchScalarGridSpec(
            num_scalar_prefetch=1,               # scalar lives in SMEM, no VMEM DMA stream
            grid=(pl.cdiv(rows, tile_r),),
            in_specs=[pl.BlockSpec((tile_r, lane), lambda i, s: (i, 0))],
            out_specs=pl.BlockSpec((tile_r, lane), lambda i, s: (i, 0)),
        ),
        compiler_params=pltpu.CompilerParams(
            dimension_semantics=("parallel",),
            vmem_limit_bytes=vmem_limit,
        ),
        cost_estimate=cost,
    )(scalar_f32, big.reshape(rows, lane))


def mult(x, y, *, force_kernel: bool = False, _tile_bytes_override=None):
    """Elementwise multiply x * y (broadcasting), matching Mult.forward."""
    x = jnp.asarray(x)
    y = jnp.asarray(y)
    out_shape = jnp.broadcast_shapes(x.shape, y.shape)
    # TODO(synk): jnp.result_type follows JAX promotion, which can differ from
    # exact PyTorch promotion for mixed int/float or weak Python-scalar operands.
    out_dtype = jnp.result_type(x.dtype, y.dtype)
    n = math.prod(out_shape) if out_shape else 1

    tile_bytes, vmem_limit, min_elems = _chip_budgets()
    if _tile_bytes_override is not None:
        tile_bytes = int(_tile_bytes_override)

    same_shape = x.shape == y.shape
    scalar_x = (x.size == 1) and not same_shape
    scalar_y = (y.size == 1) and not same_shape

    supported = ({jnp.dtype(x.dtype), jnp.dtype(y.dtype), jnp.dtype(out_dtype)}
                 <= _SUPPORTED_DTYPES)
    lane = _pick_lane_width(n) if n > 0 else None
    too_small = (n < min_elems) and not force_kernel

    # Tiny, ragged (n not a multiple of 128), unsupported-dtype (f64/complex/int),
    # or general-broadcast inputs: XLA's fused elementwise multiply is the right tool.
    if (n == 0 or too_small or lane is None or not supported
            or not (same_shape or scalar_x or scalar_y)):
        return jnp.multiply(x, y)

    rows = n // lane
    sub = max(_sublane(x.dtype), _sublane(y.dtype), _sublane(out_dtype))
    itemsize = max(x.dtype.itemsize, y.dtype.itemsize, jnp.dtype(out_dtype).itemsize)
    tile_r = _choose_tile_rows(rows, lane, itemsize, sub, tile_bytes)

    if same_shape:
        out2d = _pallas_mult_same(x, y, out_dtype, rows, lane, tile_r, vmem_limit)
    else:
        big, small = (x, y) if scalar_y else (y, x)
        s = jnp.asarray(small, dtype=jnp.float32).reshape((1,))
        out2d = _pallas_mult_scalar(big, s, out_dtype, rows, lane, tile_r, vmem_limit)

    return out2d.reshape(out_shape)


if __name__ == "__main__":
    key = jax.random.PRNGKey(0)
    kx, ky = jax.random.split(key)

    # Small NCHW-like shapes consistent with the module's usage.
    x = jax.random.normal(kx, (2, 4, 16, 16), dtype=jnp.float32)
    y = jax.random.normal(ky, (2, 4, 16, 16), dtype=jnp.float32)

    # 1) Equal-shape path (force the Pallas kernel even at this small demo size).
    out = mult(x, y, force_kernel=True)
    jax.block_until_ready(out)
    ref = x * y
    assert out.shape == ref.shape, (out.shape, ref.shape)
    assert out.dtype == ref.dtype, (out.dtype, ref.dtype)
    assert jnp.allclose(out, ref, atol=1e-6, rtol=1e-6)

    # 2) Scalar-operand path (scalar carried in SMEM via scalar prefetch).
    s = jnp.float32(1.5)
    out_s = mult(x, s, force_kernel=True)
    jax.block_until_ready(out_s)
    assert jnp.allclose(out_s, x * s, atol=1e-6, rtol=1e-6)

    # 3) Multi-step grid with a masked tail block: 21 rows of 128 lanes with a
    #    tiny tile override (8 rows/tile -> grid=3, last block ragged).
    kz, kw = jax.random.split(ky)
    a = jax.random.normal(kz, (2, 4, 21, 16), dtype=jnp.float32)
    b = jax.random.normal(kw, (2, 4, 21, 16), dtype=jnp.float32)
    out_t = mult(a, b, force_kernel=True, _tile_bytes_override=8 * 128 * 4)
    jax.block_until_ready(out_t)
    assert jnp.allclose(out_t, a * b, atol=1e-6, rtol=1e-6)

    print("KERNEL_OK")
</pallas_src>

<mosaic_0001>
module attributes {stable_mosaic.version = 11 : i64} {
  func.func @_mult_kernel(%arg0: i32, %arg1: memref<1x2048xf32, #tpu.memory_space<vmem>>, %arg2: memref<1x2048xf32, #tpu.memory_space<vmem>>, %arg3: memref<1x2048xf32, #tpu.memory_space<vmem>>) attributes {dimension_semantics = [#tpu.dimension_semantics<parallel>], iteration_bounds = array<i64: 1>, scalar_prefetch = 0 : i64, scratch_operands = 0 : i64, tpu.core_type = #tpu.core_type<tc>, window_params = [{transform_indices = @transform_0, window_bounds = array<i64: 1, 2048>}, {transform_indices = @transform_1, window_bounds = array<i64: 1, 2048>}, {transform_indices = @transform_2, window_bounds = array<i64: 1, 2048>}]} {
    %c0 = arith.constant 0 : index
    %c0_0 = arith.constant 0 : index
    %0 = vector.load %arg1[%c0, %c0_0] : memref<1x2048xf32, #tpu.memory_space<vmem>>, vector<1x2048xf32>
    %c0_1 = arith.constant 0 : index
    %c0_2 = arith.constant 0 : index
    %1 = vector.load %arg2[%c0_1, %c0_2] : memref<1x2048xf32, #tpu.memory_space<vmem>>, vector<1x2048xf32>
    %2 = arith.mulf %0, %1 : vector<1x2048xf32>
    %c0_3 = arith.constant 0 : index
    %c0_4 = arith.constant 0 : index
    %3 = vector.load %arg3[%c0_3, %c0_4] : memref<1x2048xf32, #tpu.memory_space<vmem>>, vector<1x2048xf32>
    tpu.vector_store %arg3[%c0_3, %c0_4], %2 {strides = array<i32>} : memref<1x2048xf32, #tpu.memory_space<vmem>>, vector<1x2048xf32>,
    return
  }
  func.func @transform_0(%arg0: i32) -> (i32, i32) {
    %c0_i32 = arith.constant 0 : i32
    %c0_i32_0 = arith.constant 0 : i32
    return %arg0, %c0_i32 : i32, i32
  }
  func.func @transform_1(%arg0: i32) -> (i32, i32) {
    %c0_i32 = arith.constant 0 : i32
    %c0_i32_0 = arith.constant 0 : i32
    return %arg0, %c0_i32 : i32, i32
  }
  func.func @transform_2(%arg0: i32) -> (i32, i32) {
    %c0_i32 = arith.constant 0 : i32
    %c0_i32_0 = arith.constant 0 : i32
    return %arg0, %c0_i32 : i32, i32
  }
}

</mosaic_0001>

<llo_original>
// kernel: tpu_custom_call.1
$region0: #{tpu_custom_call.1}
  #allocation0 [shape = 'u32[]', space=smem, size = 0x4, offset = 0x4, fixed_abs, tag = 'smem constant byte address 0x4 - core index']
  #allocation1 [shape = 'u32[72,128]{1,0:T(1,128)}', space=vmem, size = 0x9000, scoped, tag = 'internal scratch']
  %s0 = inlined_call_operand.hbm [shape: f32[1,2048], index: 0, kind: input, shape index: {}]
  %s1 = inlined_call_operand.hbm [shape: f32[1,2048], index: 1, kind: input, shape index: {}]
  %s2 = inlined_call_operand.hbm [shape: f32[1,2048], index: 2, kind: output, shape index: {}]
  %s3 = sld [smem:[#allocation0]]
  $region26: #{tpu_custom_call.1} parent=0
    _
  %s5 = ssub.s32 1, %s3
  %s6 = scalar_select 0, %s5, %s3
  $region1: #{tpu_custom_call.1} parent=0
    #allocation2 [shape = 'u8[8192]{0}', space=vmem, size = 0x2000, scoped, tag = 'input window, operand 0, single buffered']
    #allocation3 [shape = 's32[1]{0}', space=sflag, size = 0x4, scoped, tag = 'scoped memory for tpu_custom_call.1']
    #allocation4 [shape = 's32[1]{0}', space=sflag, size = 0x4, scoped, tag = 'scoped memory for tpu_custom_call.1']
    #allocation5 [shape = 'u8[8192]{0}', space=vmem, size = 0x2000, scoped, tag = 'input window, operand 1, single buffered']
    #allocation6 [shape = 's32[1]{0}', space=sflag, size = 0x4, scoped, tag = 'scoped memory for tpu_custom_call.1']
    #allocation7 [shape = 'u8[8192]{0}', space=vmem, size = 0x2000, scoped, tag = 'output window, operand 0, single buffered']
    %7 = vsyncpa [#allocation3], 0
    %8 = vsyncpa [#allocation6], 0
    %9 = vsyncpa [#allocation4], 0
    // Predicated region
    $region2: #{tpu_custom_call.1} parent=1 // pred_check
      _
    $region3: #{tpu_custom_call.1} parent=1 // pred_check_branch
      %11 = sbr.rel (0) target = $region5
    $region4: #{tpu_custom_call.1} parent=1 // pred_region
      %13 = vsyncadd [#allocation3], 0
      %s15 = sshll.u32 %s0, 4
      %s16 = int_to_ptr.hbm [resolvable:$true] %s15
      %s17 = sshll.u32 [#allocation2], 4
      %s18 = int_to_ptr.vmem [resolvable:$true] %s17
      %20 = dma.hbm_to_vmem [thread:$0]  %s16, 256, %s18, [#allocation3]
    $region5: #{tpu_custom_call.1} parent=1 // pred_fallthru
      _
    // Predicated region
    $region6: #{tpu_custom_call.1} parent=1 // pred_check
      _
    $region7: #{tpu_custom_call.1} parent=1 // pred_check_branch
      %22 = sbr.rel (0) target = $region9
    $region8: #{tpu_custom_call.1} parent=1 // pred_region
      %24 = vsyncadd [#allocation6], 0
      %s26 = sshll.u32 %s1, 4
      %s27 = int_to_ptr.hbm [resolvable:$true] %s26
      %s28 = sshll.u32 [#allocation5], 4
      %s29 = int_to_ptr.vmem [resolvable:$true] %s28
      %31 = dma.hbm_to_vmem [thread:$0]  %s27, 256, %s29, [#allocation6]
    $region9: #{tpu_custom_call.1} parent=1 // pred_fallthru
      _
    // Predicated region
    $region10: #{tpu_custom_call.1} parent=1 // pred_check
      _
    $region11: #{tpu_custom_call.1} parent=1 // pred_check_branch
      %33 = sbr.rel (0) target = $region13
    $region12: #{tpu_custom_call.1} parent=1 // pred_region
      %35 = dma.done [#allocation3], 256
    $region13: #{tpu_custom_call.1} parent=1 // pred_fallthru
      _
    // Predicated region
    $region14: #{tpu_custom_call.1} parent=1 // pred_check
      _
    $region15: #{tpu_custom_call.1} parent=1 // pred_check_branch
      %37 = sbr.rel (0) target = $region17
    $region16: #{tpu_custom_call.1} parent=1 // pred_region
      %39 = dma.done [#allocation6], 256
    $region17: #{tpu_custom_call.1} parent=1 // pred_fallthru
      _
    %v40 = vld [vmem:[#allocation2] sm:$0xff]
    %v41 = vld [vmem:[#allocation2 + $0x8] sm:$0xff]
    %v42 = vld [vmem:[#allocation5] sm:$0xff]
    %v43 = vld [vmem:[#allocation5 + $0x8] sm:$0xff]
    %v44 = vmul.f32 %v40, %v42
    %v45 = vmul.f32 %v41, %v43
    %46 = vst [vmem:[#allocation7] sm:$0xff] %v44
    %47 = vst [vmem:[#allocation7 + $0x8] sm:$0xff] %v45
    // Predicated region
    $region18: #{tpu_custom_call.1} parent=1 // pred_check
      _
    $region19: #{tpu_custom_call.1} parent=1 // pred_check_branch
      %49 = sbr.rel (0) target = $region21
    $region20: #{tpu_custom_call.1} parent=1 // pred_region
      %51 = vsyncadd [#allocation4], 0
      %s53 = sshll.u32 [#allocation7], 4
      %s54 = int_to_ptr.vmem [resolvable:$true] %s53
      %s55 = sshll.u32 %s2, 4
      %s56 = int_to_ptr.hbm [resolvable:$true] %s55
      %58 = dma.vmem_to_hbm [thread:$0]  %s54, 256, %s56, [#allocation4]
    $region21: #{tpu_custom_call.1} parent=1 // pred_fallthru
      _
    // Predicated region
    $region22: #{tpu_custom_call.1} parent=1 // pred_check
      _
    $region23: #{tpu_custom_call.1} parent=1 // pred_check_branch
      %60 = sbr.rel (0) target = $region25
    $region24: #{tpu_custom_call.1} parent=1 // pred_region
      %62 = dma.done [#allocation4], 256
    $region25: #{tpu_custom_call.1} parent=1 // pred_fallthru
      _
    %63 = vsyncpa [#allocation3], 1
    %64 = vsyncpa [#allocation6], 1
    %65 = vsyncpa [#allocation4], 1

</llo_original>
